<compile_context>
chip_gen: v6e
topology: v6e:2x2x1
jax: 0.10.0
libtpu: 0.0.40
codegen_flags: <defaults>
</compile_context>

<pallas_src>
import functools

import jax
import jax.numpy as jnp
from jax.experimental import pallas as pl
from jax.experimental.pallas import tpu as pltpu

NUM_LAYER = 2          # 1x Linear(25,100) + 1x Linear(100,100)  (then Linear(100,25))
IN_FEAT = 25
HID_FEAT = 100
OUT_FEAT = 25


def _round_up(x, m):
    return ((x + m - 1) // m) * m


def _ceil_div(a, b):
    return -(-a // b)


# --------------------------------------------------------------------------
# Kernel: one fused affine map per batch tile.
# --------------------------------------------------------------------------
def _affine_kernel(x_ref, w_ref, b_ref, o_ref):
    """o = x @ W_eff + b_eff for one batch tile, all f32.

    x_ref : (tb, 25)  f32   activation tile (unpadded lanes)
    w_ref : (25, 25)  f32   folded weight, resident across the grid
    b_ref : (1, 25)   f32   folded bias, resident across the grid
    o_ref : (tb, 25)  f32   output tile (unpadded lanes)
    """
    # f32 operands, f32 accumulation.  For bit-strict f32 MXU passes you may
    # additionally pass precision=jax.lax.Precision.HIGHEST here.
    o_ref[...] = (
        jnp.dot(x_ref[...], w_ref[...], preferred_element_type=jnp.float32)
        + b_ref[...]
    )


# --------------------------------------------------------------------------
# Host-side parameter folding (exact: the module has no activation functions).
# --------------------------------------------------------------------------
def fold_params(weights, biases):
    """Collapse the linear chain into a single (25,25) affine map.

    weights[i] : (in_i, out_i) == PyTorch weight.T
    biases[i]  : (1, out_i) or (out_i,)
    Returns (w_eff f32 (25,25), b_eff f32 (1,25)).
    """
    hp = jax.lax.Precision.HIGHEST      # host-side fold in true f32
    w_eff = jnp.asarray(weights[0], jnp.float32)
    b_eff = jnp.reshape(jnp.asarray(biases[0], jnp.float32), (1, -1))
    for w, b in zip(weights[1:], biases[1:]):
        w = jnp.asarray(w, jnp.float32)
        b = jnp.reshape(jnp.asarray(b, jnp.float32), (1, -1))
        b_eff = jnp.dot(b_eff, w, precision=hp) + b
        w_eff = jnp.dot(w_eff, w, precision=hp)
    return w_eff, b_eff


# --------------------------------------------------------------------------
# Batched forward.
# --------------------------------------------------------------------------
@functools.partial(jax.jit, static_argnames=("tile_b",))
def pred_matrix_linear_batched(x, w_eff, b_eff, *, tile_b=2048):
    """Batched forward: x is (B, 5, 5) or (B, 25) -> (B, 5, 5) float32."""
    B = x.shape[0]
    x2 = x.reshape(B, IN_FEAT).astype(jnp.float32)        # (B, 25), no lane pad

    tile_cap = _round_up(int(tile_b), 8)
    b8 = _round_up(B, 8)
    if b8 <= tile_cap:
        tb = b8                                            # single grid step
    else:
        # >= 8 grid steps: even megacore split on v7x + pipelined DMA,
        # capped so per-step VMEM stays tiny on every generation.
        tb = min(tile_cap, _round_up(_ceil_div(b8, 8), 8))
    b_pad = _round_up(b8, tb)
    grid = b_pad // tb

    if b_pad != B:                                         # row pad only
        x2 = jnp.pad(x2, ((0, b_pad - B), (0, 0)))

    flops = 2 * b_pad * IN_FEAT * OUT_FEAT
    bytes_accessed = (b_pad * IN_FEAT * 4 + IN_FEAT * OUT_FEAT * 4
                      + OUT_FEAT * 4 + b_pad * OUT_FEAT * 4)

    out = pl.pallas_call(
        _affine_kernel,
        out_shape=jax.ShapeDtypeStruct((b_pad, OUT_FEAT), jnp.float32),
        grid_spec=pltpu.PrefetchScalarGridSpec(
            num_scalar_prefetch=0,
            grid=(grid,),
            in_specs=[
                # activations: tiled over the batch axis, pipelined
                pl.BlockSpec((tb, IN_FEAT), lambda b: (b, 0)),
                # folded weight / bias: constant index_map -> VMEM resident
                pl.BlockSpec((IN_FEAT, OUT_FEAT), lambda b: (0, 0)),
                pl.BlockSpec((1, OUT_FEAT), lambda b: (0, 0)),
            ],
            out_specs=pl.BlockSpec((tb, OUT_FEAT), lambda b: (b, 0)),
        ),
        compiler_params=pltpu.CompilerParams(
            dimension_semantics=("parallel",)),            # megacore-shard batch
        cost_estimate=pl.CostEstimate(
            flops=flops, transcendentals=0, bytes_accessed=bytes_accessed),
    )(x2, w_eff, b_eff)

    if b_pad != B:
        out = out[:B]
    return out.reshape(B, 5, 5)


def pred_matrix_linear(x, w_eff, b_eff, *, use_pallas=True):
    """Original module interface: single (5,5) (or (25,)) input -> (5,5)."""
    if not use_pallas:
        # Tiny-batch fallback: a plain XLA affine beats a kernel launch here.
        out = (jnp.dot(x.reshape(1, IN_FEAT).astype(jnp.float32), w_eff,
                       precision=jax.lax.Precision.HIGHEST) + b_eff)
        return out.reshape(5, 5)
    return pred_matrix_linear_batched(
        x.reshape(1, IN_FEAT), w_eff, b_eff).reshape(5, 5)


# --------------------------------------------------------------------------
# Deterministic init mimicking nn.Linear default (U(-1/sqrt(fan_in), +)).
# --------------------------------------------------------------------------
def init_params(key, num_layer):
    dims = []
    for i in range(num_layer):
        dims.append((IN_FEAT if i == 0 else HID_FEAT, HID_FEAT))
    dims.append((HID_FEAT, OUT_FEAT))                      # xcor_conv: Linear(100,25)

    weights, biases = [], []
    for (fan_in, fan_out) in dims:
        key, kw, kb = jax.random.split(key, 3)
        bound = 1.0 / jnp.sqrt(jnp.float32(fan_in))
        # stored as (in_features, out_features) == PyTorch weight.T
        w = jax.random.uniform(kw, (fan_in, fan_out), jnp.float32, -bound, bound)
        b = jax.random.uniform(kb, (1, fan_out), jnp.float32, -bound, bound)
        weights.append(w)
        biases.append(b)
    return weights, biases


if __name__ == "__main__":
    key = jax.random.PRNGKey(0)
    key, kx = jax.random.split(key)

    weights, biases = init_params(key, NUM_LAYER)
    w_eff, b_eff = fold_params(weights, biases)

    # Batched inputs: many independent 5x5 matrices in one kernel call.
    B = 512
    xb = jax.random.normal(kx, (B, 5, 5), dtype=jnp.float32)

    # Pallas forward (single-step grid: whole batch fits in one tile).
    out_b = jax.block_until_ready(pred_matrix_linear_batched(xb, w_eff, b_eff))
    assert out_b.shape == (B, 5, 5)

    # Multi-step grid path (smaller tile cap) must agree.
    out_tiled = jax.block_until_ready(
        pred_matrix_linear_batched(xb, w_eff, b_eff, tile_b=128))
    assert jnp.allclose(out_b, out_tiled, atol=1e-6, rtol=1e-6)

    hp = jax.lax.Precision.HIGHEST

    # Reference 1: sequential per-layer f32 forward (exact PyTorch semantics).
    ref_seq = xb.reshape(B, IN_FEAT)
    for w, b in zip(weights, biases):
        ref_seq = jnp.dot(ref_seq, w, precision=hp) + jnp.reshape(b, (1, -1))
    ref_seq = ref_seq.reshape(B, 5, 5)

    # Reference 2: folded affine applied in plain XLA (validates the fold:
    # pure f32 re-association error, ~1e-6).
    ref_fold = (jnp.dot(xb.reshape(B, IN_FEAT), w_eff, precision=hp)
                + b_eff).reshape(B, 5, 5)
    assert jnp.allclose(ref_fold, ref_seq, atol=1e-4, rtol=1e-4)

    # Kernel vs f32 references.  Tolerance also covers the MXU's default
    # (reduced-internal-precision) matmul path; typical observed error ~1e-6.
    assert jnp.allclose(out_b, ref_seq, atol=2e-2, rtol=2e-2)
    assert jnp.allclose(out_b, ref_fold, atol=2e-2, rtol=2e-2)

    # Single-sample (original module interface): Pallas path and XLA fallback.
    out1 = jax.block_until_ready(pred_matrix_linear(xb[0], w_eff, b_eff))
    assert out1.shape == (5, 5)
    assert jnp.allclose(out1, out_b[0], atol=1e-5, rtol=1e-5)

    out1_xla = jax.block_until_ready(
        pred_matrix_linear(xb[0], w_eff, b_eff, use_pallas=False))
    assert jnp.allclose(out1, out1_xla, atol=2e-2, rtol=2e-2)

    print("KERNEL_OK")
</pallas_src>

<mosaic_0001>
module attributes {stable_mosaic.version = 11 : i64} {
  func.func @_affine_kernel(%arg0: i32, %arg1: memref<512x25xf32, #tpu.memory_space<vmem>>, %arg2: memref<25x25xf32, #tpu.memory_space<vmem>>, %arg3: memref<1x25xf32, #tpu.memory_space<vmem>>, %arg4: memref<512x25xf32, #tpu.memory_space<vmem>>) attributes {dimension_semantics = [#tpu.dimension_semantics<parallel>], iteration_bounds = array<i64: 1>, scalar_prefetch = 0 : i64, scratch_operands = 0 : i64, tpu.core_type = #tpu.core_type<tc>, window_params = [{transform_indices = @transform_0, window_bounds = array<i64: 512, 25>}, {pipeline_mode = #tpu.pipeline_mode<synchronous>, transform_indices = @transform_1, window_bounds = array<i64: 25, 25>}, {pipeline_mode = #tpu.pipeline_mode<synchronous>, transform_indices = @transform_2, window_bounds = array<i64: 1, 25>}, {transform_indices = @transform_3, window_bounds = array<i64: 512, 25>}]} {
    %c0 = arith.constant 0 : index
    %c0_0 = arith.constant 0 : index
    %0 = vector.load %arg1[%c0, %c0_0] : memref<512x25xf32, #tpu.memory_space<vmem>>, vector<512x25xf32>
    %c0_1 = arith.constant 0 : index
    %c0_2 = arith.constant 0 : index
    %1 = vector.load %arg2[%c0_1, %c0_2] : memref<25x25xf32, #tpu.memory_space<vmem>>, vector<25x25xf32>
    %cst = arith.constant dense<0.000000e+00> : vector<512x25xf32>
    %2 = tpu.matmul %0, %1, %cst {dimension_numbers = #tpu.dot_dimension_numbers<[1], [0], [0], [1], [0, 0, 1, 1], [], []>} : vector<512x25xf32>, vector<25x25xf32>, vector<512x25xf32> -> vector<512x25xf32>
    %c0_3 = arith.constant 0 : index
    %c0_4 = arith.constant 0 : index
    %3 = vector.load %arg3[%c0_3, %c0_4] : memref<1x25xf32, #tpu.memory_space<vmem>>, vector<1x25xf32>
    %4 = vector.broadcast %3 : vector<1x25xf32> to vector<512x25xf32>
    %5 = arith.addf %2, %4 : vector<512x25xf32>
    %c0_5 = arith.constant 0 : index
    %c0_6 = arith.constant 0 : index
    %6 = vector.load %arg4[%c0_5, %c0_6] : memref<512x25xf32, #tpu.memory_space<vmem>>, vector<512x25xf32>
    tpu.vector_store %arg4[%c0_5, %c0_6], %5 {strides = array<i32>} : memref<512x25xf32, #tpu.memory_space<vmem>>, vector<512x25xf32>,
    return
  }
  func.func @transform_0(%arg0: i32) -> (i32, i32) {
    %c0_i32 = arith.constant 0 : i32
    %c0_i32_0 = arith.constant 0 : i32
    return %arg0, %c0_i32 : i32, i32
  }
  func.func @transform_1(%arg0: i32) -> (i32, i32) {
    %c0_i32 = arith.constant 0 : i32
    %c0_i32_0 = arith.constant 0 : i32
    %c0_i32_1 = arith.constant 0 : i32
    return %c0_i32, %c0_i32_0 : i32, i32
  }
  func.func @transform_2(%arg0: i32) -> (i32, i32) {
    %c0_i32 = arith.constant 0 : i32
    %c0_i32_0 = arith.constant 0 : i32
    %c0_i32_1 = arith.constant 0 : i32
    return %c0_i32, %c0_i32_0 : i32, i32
  }
  func.func @transform_3(%arg0: i32) -> (i32, i32) {
    %c0_i32 = arith.constant 0 : i32
    %c0_i32_0 = arith.constant 0 : i32
    return %arg0, %c0_i32 : i32, i32
  }
}

</mosaic_0001>

<llo_original>
// kernel: pred_matrix_linear_batched.1
$region0: #{pred_matrix_linear_batched.1}
  #allocation0 [shape = 'u32[]', space=smem, size = 0x4, offset = 0x4, fixed_abs, tag = 'smem constant byte address 0x4 - core index']
  #allocation1 [shape = 'u32[144,128]{1,0:T(1,128)}', space=vmem, size = 0x12000, scoped, tag = 'internal scratch']
  %s0 = inlined_call_operand.vmem [shape: f32[512,25], index: 0, kind: input, shape index: {}]
  %s1 = inlined_call_operand.vmem [shape: f32[25,25], index: 1, kind: input, shape index: {}]
  %s2 = inlined_call_operand.vmem [shape: f32[1,25], index: 2, kind: input, shape index: {}]
  %s3 = inlined_call_operand.vmem [shape: f32[512,25], index: 3, kind: output, shape index: {}]
  %s4 = sld [smem:[#allocation0]]
  $region22: #{pred_matrix_linear_batched.1} parent=0
    _
  %s6 = ssub.s32 1, %s4
  %s7 = scalar_select 0, %s6, %s4
  // Predicated region
  $region2: #{pred_matrix_linear_batched.1} parent=0 // pred_check
    _
  $region3: #{pred_matrix_linear_batched.1} parent=0 // pred_check_branch
    %9 = sbr.rel (0) target = $region5
  $region4: #{pred_matrix_linear_batched.1} parent=0 // pred_region
    _
  $region5: #{pred_matrix_linear_batched.1} parent=0 // pred_fallthru
    _
  // Predicated region
  $region6: #{pred_matrix_linear_batched.1} parent=0 // pred_check
    _
  $region7: #{pred_matrix_linear_batched.1} parent=0 // pred_check_branch
    %11 = sbr.rel (0) target = $region9
  $region8: #{pred_matrix_linear_batched.1} parent=0 // pred_region
    _
  $region9: #{pred_matrix_linear_batched.1} parent=0 // pred_fallthru
    _
  // Predicated region
  $region10: #{pred_matrix_linear_batched.1} parent=0 // pred_check
    _
  $region11: #{pred_matrix_linear_batched.1} parent=0 // pred_check_branch
    %13 = sbr.rel (0) target = $region13
  $region12: #{pred_matrix_linear_batched.1} parent=0 // pred_region
    _
  $region13: #{pred_matrix_linear_batched.1} parent=0 // pred_fallthru
    _
  %v14 = vld [vmem:[%s0] sm:$0xff]
  %v15 = vld [vmem:[%s0 + $0x8] sm:$0xff]
  %v16 = vld [vmem:[%s0 + $0x10] sm:$0xff]
  %v17 = vld [vmem:[%s0 + $0x18] sm:$0xff]
  %v18 = vld [vmem:[%s0 + $0x20] sm:$0xff]
  %v19 = vld [vmem:[%s0 + $0x28] sm:$0xff]
  %v20 = vld [vmem:[%s0 + $0x30] sm:$0xff]
  %v21 = vld [vmem:[%s0 + $0x38] sm:$0xff]
  %v22 = vld [vmem:[%s0 + $0x40] sm:$0xff]
  %v23 = vld [vmem:[%s0 + $0x48] sm:$0xff]
  %v24 = vld [vmem:[%s0 + $0x50] sm:$0xff]
  %v25 = vld [vmem:[%s0 + $0x58] sm:$0xff]
  %v26 = vld [vmem:[%s0 + $0x60] sm:$0xff]
  %v27 = vld [vmem:[%s0 + $0x68] sm:$0xff]
  %v28 = vld [vmem:[%s0 + $0x70] sm:$0xff]
  %v29 = vld [vmem:[%s0 + $0x78] sm:$0xff]
  %v30 = vld [vmem:[%s0 + $0x80] sm:$0xff]
  %v31 = vld [vmem:[%s0 + $0x88] sm:$0xff]
  %v32 = vld [vmem:[%s0 + $0x90] sm:$0xff]
  %v33 = vld [vmem:[%s0 + $0x98] sm:$0xff]
  %v34 = vld [vmem:[%s0 + $0xa0] sm:$0xff]
  %v35 = vld [vmem:[%s0 + $0xa8] sm:$0xff]
  %v36 = vld [vmem:[%s0 + $0xb0] sm:$0xff]
  %v37 = vld [vmem:[%s0 + $0xb8] sm:$0xff]
  %v38 = vld [vmem:[%s0 + $0xc0] sm:$0xff]
  %v39 = vld [vmem:[%s0 + $0xc8] sm:$0xff]
  %v40 = vld [vmem:[%s0 + $0xd0] sm:$0xff]
  %v41 = vld [vmem:[%s0 + $0xd8] sm:$0xff]
  %v42 = vld [vmem:[%s0 + $0xe0] sm:$0xff]
  %v43 = vld [vmem:[%s0 + $0xe8] sm:$0xff]
  %v44 = vld [vmem:[%s0 + $0xf0] sm:$0xff]
  %v45 = vld [vmem:[%s0 + $0xf8] sm:$0xff]
  %v46 = vld [vmem:[%s0 + $0x100] sm:$0xff]
  %v47 = vld [vmem:[%s0 + $0x108] sm:$0xff]
  %v48 = vld [vmem:[%s0 + $0x110] sm:$0xff]
  %v49 = vld [vmem:[%s0 + $0x118] sm:$0xff]
  %v50 = vld [vmem:[%s0 + $0x120] sm:$0xff]
  %v51 = vld [vmem:[%s0 + $0x128] sm:$0xff]
  %v52 = vld [vmem:[%s0 + $0x130] sm:$0xff]
  %v53 = vld [vmem:[%s0 + $0x138] sm:$0xff]
  %v54 = vld [vmem:[%s0 + $0x140] sm:$0xff]
  %v55 = vld [vmem:[%s0 + $0x148] sm:$0xff]
  %v56 = vld [vmem:[%s0 + $0x150] sm:$0xff]
  %v57 = vld [vmem:[%s0 + $0x158] sm:$0xff]
  %v58 = vld [vmem:[%s0 + $0x160] sm:$0xff]
  %v59 = vld [vmem:[%s0 + $0x168] sm:$0xff]
  %v60 = vld [vmem:[%s0 + $0x170] sm:$0xff]
  %v61 = vld [vmem:[%s0 + $0x178] sm:$0xff]
  %v62 = vld [vmem:[%s0 + $0x180] sm:$0xff]
  %v63 = vld [vmem:[%s0 + $0x188] sm:$0xff]
  %v64 = vld [vmem:[%s0 + $0x190] sm:$0xff]
  %v65 = vld [vmem:[%s0 + $0x198] sm:$0xff]
  %v66 = vld [vmem:[%s0 + $0x1a0] sm:$0xff]
  %v67 = vld [vmem:[%s0 + $0x1a8] sm:$0xff]
  %v68 = vld [vmem:[%s0 + $0x1b0] sm:$0xff]
  %v69 = vld [vmem:[%s0 + $0x1b8] sm:$0xff]
  %v70 = vld [vmem:[%s0 + $0x1c0] sm:$0xff]
  %v71 = vld [vmem:[%s0 + $0x1c8] sm:$0xff]
  %v72 = vld [vmem:[%s0 + $0x1d0] sm:$0xff]
  %v73 = vld [vmem:[%s0 + $0x1d8] sm:$0xff]
  %v74 = vld [vmem:[%s0 + $0x1e0] sm:$0xff]
  %v75 = vld [vmem:[%s0 + $0x1e8] sm:$0xff]
  %v76 = vld [vmem:[%s0 + $0x1f0] sm:$0xff]
  %v77 = vld [vmem:[%s0 + $0x1f8] sm:$0xff]
  %v78 = vld [vmem:[%s1] sm:$0xff]
  %v79 = vld [vmem:[%s1 + $0x8] sm:$0xff]
  %v80 = vld [vmem:[%s1 + $0x10] sm:$0xff]
  %v81 = vld [vmem:[%s1 + $0x18] sm:$0x1]
  %v82 = vld [vmem:[%s2] sm:$0x1]
  %v84 = vlaneseq
  %v85 = vshrl.u32 %v84, 7
  %v86 = vsub.s32 0, %v85
  %v87 = vrot.slane %v82, %v86
  %vm89 = vcmask 203776
  %v91 = vsel %vm89, %v14, 0
  %v94 = vsel %vm89, %v15, 0
  %v97 = vsel %vm89, %v16, 0
  %v100 = vsel %vm89, %v17, 0
  %v103 = vsel %vm89, %v18, 0
  %v106 = vsel %vm89, %v19, 0
  %v109 = vsel %vm89, %v20, 0
  %v112 = vsel %vm89, %v21, 0
  %v115 = vsel %vm89, %v22, 0
  %v118 = vsel %vm89, %v23, 0
  %v121 = vsel %vm89, %v24, 0
  %v124 = vsel %vm89, %v25, 0
  %v127 = vsel %vm89, %v26, 0
  %v130 = vsel %vm89, %v27, 0
  %v133 = vsel %vm89, %v28, 0
  %v136 = vsel %vm89, %v29, 0
  %v139 = vsel %vm89, %v30, 0
  %v142 = vsel %vm89, %v31, 0
  %v145 = vsel %vm89, %v32, 0
  %v148 = vsel %vm89, %v33, 0
  %v151 = vsel %vm89, %v34, 0
  %v154 = vsel %vm89, %v35, 0
  %v157 = vsel %vm89, %v36, 0
  %v160 = vsel %vm89, %v37, 0
  %v163 = vsel %vm89, %v38, 0
  %v166 = vsel %vm89, %v39, 0
  %v169 = vsel %vm89, %v40, 0
  %v172 = vsel %vm89, %v41, 0
  %v175 = vsel %vm89, %v42, 0
  %v178 = vsel %vm89, %v43, 0
  %v181 = vsel %vm89, %v44, 0
  %v184 = vsel %vm89, %v45, 0
  %v187 = vsel %vm89, %v46, 0
  %v190 = vsel %vm89, %v47, 0
  %v193 = vsel %vm89, %v48, 0
  %v196 = vsel %vm89, %v49, 0
  %v199 = vsel %vm89, %v50, 0
  %v202 = vsel %vm89, %v51, 0
  %v205 = vsel %vm89, %v52, 0
  %v208 = vsel %vm89, %v53, 0
  %v211 = vsel %vm89, %v54, 0
  %v214 = vsel %vm89, %v55, 0
  %v217 = vsel %vm89, %v56, 0
  %v220 = vsel %vm89, %v57, 0
  %v223 = vsel %vm89, %v58, 0
  %v226 = vsel %vm89, %v59, 0
  %v229 = vsel %vm89, %v60, 0
  %v232 = vsel %vm89, %v61, 0
  %v235 = vsel %vm89, %v62, 0
  %v238 = vsel %vm89, %v63, 0
  %v241 = vsel %vm89, %v64, 0
  %v244 = vsel %vm89, %v65, 0
  %v247 = vsel %vm89, %v66, 0
  %v250 = vsel %vm89, %v67, 0
  %v253 = vsel %vm89, %v68, 0
  %v256 = vsel %vm89, %v69, 0
  %v259 = vsel %vm89, %v70, 0
  %v262 = vsel %vm89, %v71, 0
  %v265 = vsel %vm89, %v72, 0
  %v268 = vsel %vm89, %v73, 0
  %v271 = vsel %vm89, %v74, 0
  %v274 = vsel %vm89, %v75, 0
  %v277 = vsel %vm89, %v76, 0
  %v280 = vsel %vm89, %v77, 0
  %vm282 = vcmask 1040384
  %v284 = vsel %vm282, %v81, 0
  %286 = vmatprep.subr.mxu0 0.0
  %287 = vmatpush1.msra.mxu0 0.0
  %288 = vmatprep.subr.mxu0 0.0
  %289 = vmatpush1.msra.mxu0 0.0
  %290 = vmatprep.subr.mxu0 0.0
  %291 = vmatpush1.msra.mxu0 0.0
  %292 = vmatprep.subr.mxu0 0.0
  %293 = vmatpush1.msra.mxu0 0.0
  %294 = vmatprep.subr.mxu0 0.0
  %295 = vmatpush1.msra.mxu0 0.0
  %296 = vmatprep.subr.mxu0 0.0
  %297 = vmatpush1.msra.mxu0 0.0
  %298 = vmatprep.subr.mxu0 0.0
  %299 = vmatpush1.msra.mxu0 0.0
  %300 = vmatprep.subr.mxu0 0.0
  %301 = vmatpush1.msra.mxu0 0.0
  %302 = vmatprep.subr.mxu0 0.0
  %303 = vmatpush1.msra.mxu0 0.0
  %304 = vmatprep.subr.mxu0 0.0
  %305 = vmatpush1.msra.mxu0 0.0
  %306 = vmatprep.subr.mxu0 0.0
  %307 = vmatpush1.msra.mxu0 0.0
  %308 = vmatprep.subr.mxu0 0.0
  %309 = vmatpush1.msra.mxu0 0.0
  %310 = vmatprep.subr.mxu0 0.0
  %311 = vmatpush1.msra.mxu0 %v284
  %312 = vmatprep.subr.mxu0 0.0
  %313 = vmatpush1.msra.mxu0 %v80
  %314 = vmatprep.subr.mxu0 0.0
  %315 = vmatpush1.msra.mxu0 %v79
  %316 = vmatprep.subr.mxu0 0.0
  %317 = vmatpush1.msra.mxu0 %v78
  %318 = vmatprep.subr.mxu0 0.0
  %319 = vmatpush2.msra.mxu0 0.0
  %320 = vmatprep.subr.mxu0 0.0
  %321 = vmatpush2.msra.mxu0 0.0
  %322 = vmatprep.subr.mxu0 0.0
  %323 = vmatpush2.msra.mxu0 0.0
  %324 = vmatprep.subr.mxu0 0.0
  %325 = vmatpush2.msra.mxu0 0.0
  %326 = vmatprep.subr.mxu0 0.0
  %327 = vmatpush2.msra.mxu0 0.0
  %328 = vmatprep.subr.mxu0 0.0
  %329 = vmatpush2.msra.mxu0 0.0
  %330 = vmatprep.subr.mxu0 0.0
  %331 = vmatpush2.msra.mxu0 0.0
  %332 = vmatprep.subr.mxu0 0.0
  %333 = vmatpush2.msra.mxu0 0.0
  %334 = vmatprep.subr.mxu0 0.0
  %335 = vmatpush2.msra.mxu0 0.0
  %336 = vmatprep.subr.mxu0 0.0
  %337 = vmatpush2.msra.mxu0 0.0
  %338 = vmatprep.subr.mxu0 0.0
  %339 = vmatpush2.msra.mxu0 0.0
  %340 = vmatprep.subr.mxu0 0.0
  %341 = vmatpush2.msra.mxu0 0.0
  %342 = vmatprep.subr.mxu0 0.0
  %343 = vmatpush2.msra.mxu0 0.0
  %344 = vmatprep.subr.mxu0 0.0
  %345 = vmatpush2.msra.mxu0 0.0
  %346 = vmatprep.subr.mxu0 0.0
  %347 = vmatpush2.msra.mxu0 0.0
  %348 = vmatprep.subr.mxu0 0.0
  %349 = vmatpush2.msra.mxu0 0.0
  %350 = vmatprep.mubr.f32.mxu0 0.0
  %351 = vmatmul.mubr.f32.gmra.mxu0 %v91
  %v352 = vpop.f32.mrf.mxu0
  %v353 = vadd.f32 %v87, %v352
  %v354 = vpop.f32.mrf.mxu0
  %355 = vmatprep.mubr.f32.mxu0 0.0
  %356 = vmatmul.mubr.f32.gmra.mxu0 %v94
  %v357 = vpop.f32.mrf.mxu0
  %v358 = vadd.f32 %v87, %v357
  %v359 = vpop.f32.mrf.mxu0
  %360 = vmatprep.mubr.f32.mxu0 0.0
  %361 = vmatmul.mubr.f32.gmra.mxu0 %v97
  %v362 = vpop.f32.mrf.mxu0
  %v363 = vadd.f32 %v87, %v362
  %v364 = vpop.f32.mrf.mxu0
  %365 = vmatprep.mubr.f32.mxu0 0.0
  %366 = vmatmul.mubr.f32.gmra.mxu0 %v100
  %v367 = vpop.f32.mrf.mxu0
  %v368 = vadd.f32 %v87, %v367
  %v369 = vpop.f32.mrf.mxu0
  %370 = vmatprep.mubr.f32.mxu0 0.0
  %371 = vmatmul.mubr.f32.gmra.mxu0 %v103
  %v372 = vpop.f32.mrf.mxu0
  %v373 = vadd.f32 %v87, %v372
  %v374 = vpop.f32.mrf.mxu0
  %375 = vmatprep.mubr.f32.mxu0 0.0
  %376 = vmatmul.mubr.f32.gmra.mxu0 %v106
  %v377 = vpop.f32.mrf.mxu0
  %v378 = vadd.f32 %v87, %v377
  %v379 = vpop.f32.mrf.mxu0
  %380 = vmatprep.mubr.f32.mxu0 0.0
  %381 = vmatmul.mubr.f32.gmra.mxu0 %v109
  %v382 = vpop.f32.mrf.mxu0
  %v383 = vadd.f32 %v87, %v382
  %v384 = vpop.f32.mrf.mxu0
  %385 = vmatprep.mubr.f32.mxu0 0.0
  %386 = vmatmul.mubr.f32.gmra.mxu0 %v112
  %v387 = vpop.f32.mrf.mxu0
  %v388 = vadd.f32 %v87, %v387
  %v389 = vpop.f32.mrf.mxu0
  %390 = vmatprep.mubr.f32.mxu0 0.0
  %391 = vmatmul.mubr.f32.gmra.mxu0 %v115
  %v392 = vpop.f32.mrf.mxu0
  %v393 = vadd.f32 %v87, %v392
  %v394 = vpop.f32.mrf.mxu0
  %395 = vmatprep.mubr.f32.mxu0 0.0
  %396 = vmatmul.mubr.f32.gmra.mxu0 %v118
  %v397 = vpop.f32.mrf.mxu0
  %v398 = vadd.f32 %v87, %v397
  %v399 = vpop.f32.mrf.mxu0
  %400 = vmatprep.mubr.f32.mxu0 0.0
  %401 = vmatmul.mubr.f32.gmra.mxu0 %v121
  %v402 = vpop.f32.mrf.mxu0
  %v403 = vadd.f32 %v87, %v402
  %v404 = vpop.f32.mrf.mxu0
  %405 = vmatprep.mubr.f32.mxu0 0.0
  %406 = vmatmul.mubr.f32.gmra.mxu0 %v124
  %v407 = vpop.f32.mrf.mxu0
  %v408 = vadd.f32 %v87, %v407
  %v409 = vpop.f32.mrf.mxu0
  %410 = vmatprep.mubr.f32.mxu0 0.0
  %411 = vmatmul.mubr.f32.gmra.mxu0 %v127
  %v412 = vpop.f32.mrf.mxu0
  %v413 = vadd.f32 %v87, %v412
  %v414 = vpop.f32.mrf.mxu0
  %415 = vmatprep.mubr.f32.mxu0 0.0
  %416 = vmatmul.mubr.f32.gmra.mxu0 %v130
  %v417 = vpop.f32.mrf.mxu0
  %v418 = vadd.f32 %v87, %v417
  %v419 = vpop.f32.mrf.mxu0
  %420 = vmatprep.mubr.f32.mxu0 0.0
  %421 = vmatmul.mubr.f32.gmra.mxu0 %v133
  %v422 = vpop.f32.mrf.mxu0
  %v423 = vadd.f32 %v87, %v422
  %v424 = vpop.f32.mrf.mxu0
  %425 = vmatprep.mubr.f32.mxu0 0.0
  %426 = vmatmul.mubr.f32.gmra.mxu0 %v136
  %v427 = vpop.f32.mrf.mxu0
  %v428 = vadd.f32 %v87, %v427
  %v429 = vpop.f32.mrf.mxu0
  %430 = vmatprep.mubr.f32.mxu0 0.0
  %431 = vmatmul.mubr.f32.gmra.mxu0 %v139
  %v432 = vpop.f32.mrf.mxu0
  %v433 = vadd.f32 %v87, %v432
  %v434 = vpop.f32.mrf.mxu0
  %435 = vmatprep.mubr.f32.mxu0 0.0
  %436 = vmatmul.mubr.f32.gmra.mxu0 %v142
  %v437 = vpop.f32.mrf.mxu0
  %v438 = vadd.f32 %v87, %v437
  %v439 = vpop.f32.mrf.mxu0
  %440 = vmatprep.mubr.f32.mxu0 0.0
  %441 = vmatmul.mubr.f32.gmra.mxu0 %v145
  %v442 = vpop.f32.mrf.mxu0
  %v443 = vadd.f32 %v87, %v442
  %v444 = vpop.f32.mrf.mxu0
  %445 = vmatprep.mubr.f32.mxu0 0.0
  %446 = vmatmul.mubr.f32.gmra.mxu0 %v148
  %v447 = vpop.f32.mrf.mxu0
  %v448 = vadd.f32 %v87, %v447
  %v449 = vpop.f32.mrf.mxu0
  %450 = vmatprep.mubr.f32.mxu0 0.0
  %451 = vmatmul.mubr.f32.gmra.mxu0 %v151
  %v452 = vpop.f32.mrf.mxu0
  %v453 = vadd.f32 %v87, %v452
  %v454 = vpop.f32.mrf.mxu0
  %455 = vmatprep.mubr.f32.mxu0 0.0
  %456 = vmatmul.mubr.f32.gmra.mxu0 %v154
  %v457 = vpop.f32.mrf.mxu0
  %v458 = vadd.f32 %v87, %v457
  %v459 = vpop.f32.mrf.mxu0
  %460 = vmatprep.mubr.f32.mxu0 0.0
  %461 = vmatmul.mubr.f32.gmra.mxu0 %v157
  %v462 = vpop.f32.mrf.mxu0
  %v463 = vadd.f32 %v87, %v462
  %v464 = vpop.f32.mrf.mxu0
  %465 = vmatprep.mubr.f32.mxu0 0.0
  %466 = vmatmul.mubr.f32.gmra.mxu0 %v160
  %v467 = vpop.f32.mrf.mxu0
  %v468 = vadd.f32 %v87, %v467
  %v469 = vpop.f32.mrf.mxu0
  %470 = vmatprep.mubr.f32.mxu0 0.0
  %471 = vmatmul.mubr.f32.gmra.mxu0 %v163
  %v472 = vpop.f32.mrf.mxu0
  %v473 = vadd.f32 %v87, %v472
  %v474 = vpop.f32.mrf.mxu0
  %475 = vmatprep.mubr.f32.mxu0 0.0
  %476 = vmatmul.mubr.f32.gmra.mxu0 %v166
  %v477 = vpop.f32.mrf.mxu0
  %v478 = vadd.f32 %v87, %v477
  %v479 = vpop.f32.mrf.mxu0
  %480 = vmatprep.mubr.f32.mxu0 0.0
  %481 = vmatmul.mubr.f32.gmra.mxu0 %v169
  %v482 = vpop.f32.mrf.mxu0
  %v483 = vadd.f32 %v87, %v482
  %v484 = vpop.f32.mrf.mxu0
  %485 = vmatprep.mubr.f32.mxu0 0.0
  %486 = vmatmul.mubr.f32.gmra.mxu0 %v172
  %v487 = vpop.f32.mrf.mxu0
  %v488 = vadd.f32 %v87, %v487
  %v489 = vpop.f32.mrf.mxu0
  %490 = vmatprep.mubr.f32.mxu0 0.0
  %491 = vmatmul.mubr.f32.gmra.mxu0 %v175
  %v492 = vpop.f32.mrf.mxu0
  %v493 = vadd.f32 %v87, %v492
  %v494 = vpop.f32.mrf.mxu0
  %495 = vmatprep.mubr.f32.mxu0 0.0
  %496 = vmatmul.mubr.f32.gmra.mxu0 %v178
  %v497 = vpop.f32.mrf.mxu0
  %v498 = vadd.f32 %v87, %v497
  %v499 = vpop.f32.mrf.mxu0
  %500 = vmatprep.mubr.f32.mxu0 0.0
  %501 = vmatmul.mubr.f32.gmra.mxu0 %v181
  %v502 = vpop.f32.mrf.mxu0
  %v503 = vadd.f32 %v87, %v502
  %v504 = vpop.f32.mrf.mxu0
  %505 = vmatprep.mubr.f32.mxu0 0.0
  %506 = vmatmul.mubr.f32.gmra.mxu0 %v184
  %v507 = vpop.f32.mrf.mxu0
  %v508 = vadd.f32 %v87, %v507
  %v509 = vpop.f32.mrf.mxu0
  %510 = vmatprep.mubr.f32.mxu0 0.0
  %511 = vmatmul.mubr.f32.gmra.mxu0 %v187
  %v512 = vpop.f32.mrf.mxu0
  %v513 = vadd.f32 %v87, %v512
  %v514 = vpop.f32.mrf.mxu0
  %515 = vmatprep.mubr.f32.mxu0 0.0
  %516 = vmatmul.mubr.f32.gmra.mxu0 %v190
  %v517 = vpop.f32.mrf.mxu0
  %v518 = vadd.f32 %v87, %v517
  %v519 = vpop.f32.mrf.mxu0
  %520 = vmatprep.mubr.f32.mxu0 0.0
  %521 = vmatmul.mubr.f32.gmra.mxu0 %v193
  %v522 = vpop.f32.mrf.mxu0
  %v523 = vadd.f32 %v87, %v522
  %v524 = vpop.f32.mrf.mxu0
  %525 = vmatprep.mubr.f32.mxu0 0.0
  %526 = vmatmul.mubr.f32.gmra.mxu0 %v196
  %v527 = vpop.f32.mrf.mxu0
  %v528 = vadd.f32 %v87, %v527
  %v529 = vpop.f32.mrf.mxu0
  %530 = vmatprep.mubr.f32.mxu0 0.0
  %531 = vmatmul.mubr.f32.gmra.mxu0 %v199
  %v532 = vpop.f32.mrf.mxu0
  %v533 = vadd.f32 %v87, %v532
  %v534 = vpop.f32.mrf.mxu0
  %535 = vmatprep.mubr.f32.mxu0 0.0
  %536 = vmatmul.mubr.f32.gmra.mxu0 %v202
  %v537 = vpop.f32.mrf.mxu0
  %v538 = vadd.f32 %v87, %v537
  %v539 = vpop.f32.mrf.mxu0
  %540 = vmatprep.mubr.f32.mxu0 0.0
  %541 = vmatmul.mubr.f32.gmra.mxu0 %v205
  %v542 = vpop.f32.mrf.mxu0
  %v543 = vadd.f32 %v87, %v542
  %v544 = vpop.f32.mrf.mxu0
  %545 = vmatprep.mubr.f32.mxu0 0.0
  %546 = vmatmul.mubr.f32.gmra.mxu0 %v208
  %v547 = vpop.f32.mrf.mxu0
  %v548 = vadd.f32 %v87, %v547
  %v549 = vpop.f32.mrf.mxu0
  %550 = vmatprep.mubr.f32.mxu0 0.0
  %551 = vmatmul.mubr.f32.gmra.mxu0 %v211
  %v552 = vpop.f32.mrf.mxu0
  %v553 = vadd.f32 %v87, %v552
  %v554 = vpop.f32.mrf.mxu0
  %555 = vmatprep.mubr.f32.mxu0 0.0
  %556 = vmatmul.mubr.f32.gmra.mxu0 %v214
  %v557 = vpop.f32.mrf.mxu0
  %v558 = vadd.f32 %v87, %v557
  %v559 = vpop.f32.mrf.mxu0
  %560 = vmatprep.mubr.f32.mxu0 0.0
  %561 = vmatmul.mubr.f32.gmra.mxu0 %v217
  %v562 = vpop.f32.mrf.mxu0
  %v563 = vadd.f32 %v87, %v562
  %v564 = vpop.f32.mrf.mxu0
  %565 = vmatprep.mubr.f32.mxu0 0.0
  %566 = vmatmul.mubr.f32.gmra.mxu0 %v220
  %v567 = vpop.f32.mrf.mxu0
  %v568 = vadd.f32 %v87, %v567
  %v569 = vpop.f32.mrf.mxu0
  %570 = vmatprep.mubr.f32.mxu0 0.0
  %571 = vmatmul.mubr.f32.gmra.mxu0 %v223
  %v572 = vpop.f32.mrf.mxu0
  %v573 = vadd.f32 %v87, %v572
  %v574 = vpop.f32.mrf.mxu0
  %575 = vmatprep.mubr.f32.mxu0 0.0
  %576 = vmatmul.mubr.f32.gmra.mxu0 %v226
  %v577 = vpop.f32.mrf.mxu0
  %v578 = vadd.f32 %v87, %v577
  %v579 = vpop.f32.mrf.mxu0
  %580 = vmatprep.mubr.f32.mxu0 0.0
  %581 = vmatmul.mubr.f32.gmra.mxu0 %v229
  %v582 = vpop.f32.mrf.mxu0
  %v583 = vadd.f32 %v87, %v582
  %v584 = vpop.f32.mrf.mxu0
  %585 = vmatprep.mubr.f32.mxu0 0.0
  %586 = vmatmul.mubr.f32.gmra.mxu0 %v232
  %v587 = vpop.f32.mrf.mxu0
  %v588 = vadd.f32 %v87, %v587
  %v589 = vpop.f32.mrf.mxu0
  %590 = vmatprep.mubr.f32.mxu0 0.0
  %591 = vmatmul.mubr.f32.gmra.mxu0 %v235
  %v592 = vpop.f32.mrf.mxu0
  %v593 = vadd.f32 %v87, %v592
  %v594 = vpop.f32.mrf.mxu0
  %595 = vmatprep.mubr.f32.mxu0 0.0
  %596 = vmatmul.mubr.f32.gmra.mxu0 %v238
  %v597 = vpop.f32.mrf.mxu0
  %v598 = vadd.f32 %v87, %v597
  %v599 = vpop.f32.mrf.mxu0
  %600 = vmatprep.mubr.f32.mxu0 0.0
  %601 = vmatmul.mubr.f32.gmra.mxu0 %v241
  %v602 = vpop.f32.mrf.mxu0
  %v603 = vadd.f32 %v87, %v602
  %v604 = vpop.f32.mrf.mxu0
  %605 = vmatprep.mubr.f32.mxu0 0.0
  %606 = vmatmul.mubr.f32.gmra.mxu0 %v244
  %v607 = vpop.f32.mrf.mxu0
  %v608 = vadd.f32 %v87, %v607
  %v609 = vpop.f32.mrf.mxu0
  %610 = vmatprep.mubr.f32.mxu0 0.0
  %611 = vmatmul.mubr.f32.gmra.mxu0 %v247
  %v612 = vpop.f32.mrf.mxu0
  %v613 = vadd.f32 %v87, %v612
  %v614 = vpop.f32.mrf.mxu0
  %615 = vmatprep.mubr.f32.mxu0 0.0
  %616 = vmatmul.mubr.f32.gmra.mxu0 %v250
  %v617 = vpop.f32.mrf.mxu0
  %v618 = vadd.f32 %v87, %v617
  %v619 = vpop.f32.mrf.mxu0
  %620 = vmatprep.mubr.f32.mxu0 0.0
  %621 = vmatmul.mubr.f32.gmra.mxu0 %v253
  %v622 = vpop.f32.mrf.mxu0
  %v623 = vadd.f32 %v87, %v622
  %v624 = vpop.f32.mrf.mxu0
  %625 = vmatprep.mubr.f32.mxu0 0.0
  %626 = vmatmul.mubr.f32.gmra.mxu0 %v256
  %v627 = vpop.f32.mrf.mxu0
  %v628 = vadd.f32 %v87, %v627
  %v629 = vpop.f32.mrf.mxu0
  %630 = vmatprep.mubr.f32.mxu0 0.0
  %631 = vmatmul.mubr.f32.gmra.mxu0 %v259
  %v632 = vpop.f32.mrf.mxu0
  %v633 = vadd.f32 %v87, %v632
  %v634 = vpop.f32.mrf.mxu0
  %635 = vmatprep.mubr.f32.mxu0 0.0
  %636 = vmatmul.mubr.f32.gmra.mxu0 %v262
  %v637 = vpop.f32.mrf.mxu0
  %v638 = vadd.f32 %v87, %v637
  %v639 = vpop.f32.mrf.mxu0
  %640 = vmatprep.mubr.f32.mxu0 0.0
  %641 = vmatmul.mubr.f32.gmra.mxu0 %v265
  %v642 = vpop.f32.mrf.mxu0
  %v643 = vadd.f32 %v87, %v642
  %v644 = vpop.f32.mrf.mxu0
  %645 = vmatprep.mubr.f32.mxu0 0.0
  %646 = vmatmul.mubr.f32.gmra.mxu0 %v268
  %v647 = vpop.f32.mrf.mxu0
  %v648 = vadd.f32 %v87, %v647
  %v649 = vpop.f32.mrf.mxu0
  %650 = vmatprep.mubr.f32.mxu0 0.0
  %651 = vmatmul.mubr.f32.gmra.mxu0 %v271
  %v652 = vpop.f32.mrf.mxu0
  %v653 = vadd.f32 %v87, %v652
  %v654 = vpop.f32.mrf.mxu0
  %655 = vmatprep.mubr.f32.mxu0 0.0
  %656 = vmatmul.mubr.f32.gmra.mxu0 %v274
  %v657 = vpop.f32.mrf.mxu0
  %v658 = vadd.f32 %v87, %v657
  %v659 = vpop.f32.mrf.mxu0
  %660 = vmatprep.mubr.f32.mxu0 0.0
  %661 = vmatmul.mubr.f32.gmra.mxu0 %v277
  %v662 = vpop.f32.mrf.mxu0
  %v663 = vadd.f32 %v87, %v662
  %v664 = vpop.f32.mrf.mxu0
  %665 = vmatprep.mubr.f32.mxu0 0.0
  %666 = vmatmul.mubr.f32.gmra.mxu0 %v280
  %v667 = vpop.f32.mrf.mxu0
  %v668 = vadd.f32 %v87, %v667
  %v669 = vpop.f32.mrf.mxu0
  %670 = vdwg.mxu0
  %671 = vst.msk [vmem:[%s3] sm:$0xff] %vm89, %v353
  %672 = vst.msk [vmem:[%s3 + $0x8] sm:$0xff] %vm89, %v358
  %673 = vst.msk [vmem:[%s3 + $0x10] sm:$0xff] %vm89, %v363
  %674 = vst.msk [vmem:[%s3 + $0x18] sm:$0xff] %vm89, %v368
  %675 = vst.msk [vmem:[%s3 + $0x20] sm:$0xff] %vm89, %v373
  %676 = vst.msk [vmem:[%s3 + $0x28] sm:$0xff] %vm89, %v378
  %677 = vst.msk [vmem:[%s3 + $0x30] sm:$0xff] %vm89, %v383
  %678 = vst.msk [vmem:[%s3 + $0x38] sm:$0xff] %vm89, %v388
  %679 = vst.msk [vmem:[%s3 + $0x40] sm:$0xff] %vm89, %v393
  %680 = vst.msk [vmem:[%s3 + $0x48] sm:$0xff] %vm89, %v398
  %681 = vst.msk [vmem:[%s3 + $0x50] sm:$0xff] %vm89, %v403
  %682 = vst.msk [vmem:[%s3 + $0x58] sm:$0xff] %vm89, %v408
  %683 = vst.msk [vmem:[%s3 + $0x60] sm:$0xff] %vm89, %v413
  %684 = vst.msk [vmem:[%s3 + $0x68] sm:$0xff] %vm89, %v418
  %685 = vst.msk [vmem:[%s3 + $0x70] sm:$0xff] %vm89, %v423
  %686 = vst.msk [vmem:[%s3 + $0x78] sm:$0xff] %vm89, %v428
  %687 = vst.msk [vmem:[%s3 + $0x80] sm:$0xff] %vm89, %v433
  %688 = vst.msk [vmem:[%s3 + $0x88] sm:$0xff] %vm89, %v438
  %689 = vst.msk [vmem:[%s3 + $0x90] sm:$0xff] %vm89, %v443
  %690 = vst.msk [vmem:[%s3 + $0x98] sm:$0xff] %vm89, %v448
  %691 = vst.msk [vmem:[%s3 + $0xa0] sm:$0xff] %vm89, %v453
  %692 = vst.msk [vmem:[%s3 + $0xa8] sm:$0xff] %vm89, %v458
  %693 = vst.msk [vmem:[%s3 + $0xb0] sm:$0xff] %vm89, %v463
  %694 = vst.msk [vmem:[%s3 + $0xb8] sm:$0xff] %vm89, %v468
  %695 = vst.msk [vmem:[%s3 + $0xc0] sm:$0xff] %vm89, %v473
  %696 = vst.msk [vmem:[%s3 + $0xc8] sm:$0xff] %vm89, %v478
  %697 = vst.msk [vmem:[%s3 + $0xd0] sm:$0xff] %vm89, %v483
  %698 = vst.msk [vmem:[%s3 + $0xd8] sm:$0xff] %vm89, %v488
  %699 = vst.msk [vmem:[%s3 + $0xe0] sm:$0xff] %vm89, %v493
  %700 = vst.msk [vmem:[%s3 + $0xe8] sm:$0xff] %vm89, %v498
  %701 = vst.msk [vmem:[%s3 + $0xf0] sm:$0xff] %vm89, %v503
  %702 = vst.msk [vmem:[%s3 + $0xf8] sm:$0xff] %vm89, %v508
  %703 = vst.msk [vmem:[%s3 + $0x100] sm:$0xff] %vm89, %v513
  %704 = vst.msk [vmem:[%s3 + $0x108] sm:$0xff] %vm89, %v518
  %705 = vst.msk [vmem:[%s3 + $0x110] sm:$0xff] %vm89, %v523
  %706 = vst.msk [vmem:[%s3 + $0x118] sm:$0xff] %vm89, %v528
  %707 = vst.msk [vmem:[%s3 + $0x120] sm:$0xff] %vm89, %v533
  %708 = vst.msk [vmem:[%s3 + $0x128] sm:$0xff] %vm89, %v538
  %709 = vst.msk [vmem:[%s3 + $0x130] sm:$0xff] %vm89, %v543
  %710 = vst.msk [vmem:[%s3 + $0x138] sm:$0xff] %vm89, %v548
  %711 = vst.msk [vmem:[%s3 + $0x140] sm:$0xff] %vm89, %v553
  %712 = vst.msk [vmem:[%s3 + $0x148] sm:$0xff] %vm89, %v558
  %713 = vst.msk [vmem:[%s3 + $0x150] sm:$0xff] %vm89, %v563
  %714 = vst.msk [vmem:[%s3 + $0x158] sm:$0xff] %vm89, %v568
  %715 = vst.msk [vmem:[%s3 + $0x160] sm:$0xff] %vm89, %v573
  %716 = vst.msk [vmem:[%s3 + $0x168] sm:$0xff] %vm89, %v578
  %717 = vst.msk [vmem:[%s3 + $0x170] sm:$0xff] %vm89, %v583
  %718 = vst.msk [vmem:[%s3 + $0x178] sm:$0xff] %vm89, %v588
  %719 = vst.msk [vmem:[%s3 + $0x180] sm:$0xff] %vm89, %v593
  %720 = vst.msk [vmem:[%s3 + $0x188] sm:$0xff] %vm89, %v598
  %721 = vst.msk [vmem:[%s3 + $0x190] sm:$0xff] %vm89, %v603
  %722 = vst.msk [vmem:[%s3 + $0x198] sm:$0xff] %vm89, %v608
  %723 = vst.msk [vmem:[%s3 + $0x1a0] sm:$0xff] %vm89, %v613
  %724 = vst.msk [vmem:[%s3 + $0x1a8] sm:$0xff] %vm89, %v618
  %725 = vst.msk [vmem:[%s3 + $0x1b0] sm:$0xff] %vm89, %v623
  %726 = vst.msk [vmem:[%s3 + $0x1b8] sm:$0xff] %vm89, %v628
  %727 = vst.msk [vmem:[%s3 + $0x1c0] sm:$0xff] %vm89, %v633
  %728 = vst.msk [vmem:[%s3 + $0x1c8] sm:$0xff] %vm89, %v638
  %729 = vst.msk [vmem:[%s3 + $0x1d0] sm:$0xff] %vm89, %v643
  %730 = vst.msk [vmem:[%s3 + $0x1d8] sm:$0xff] %vm89, %v648
  %731 = vst.msk [vmem:[%s3 + $0x1e0] sm:$0xff] %vm89, %v653
  %732 = vst.msk [vmem:[%s3 + $0x1e8] sm:$0xff] %vm89, %v658
  %733 = vst.msk [vmem:[%s3 + $0x1f0] sm:$0xff] %vm89, %v663
  %734 = vst.msk [vmem:[%s3 + $0x1f8] sm:$0xff] %vm89, %v668
  // Predicated region
  $region14: #{pred_matrix_linear_batched.1} parent=0 // pred_check
    _
  $region15: #{pred_matrix_linear_batched.1} parent=0 // pred_check_branch
    %736 = sbr.rel (0) target = $region17
  $region16: #{pred_matrix_linear_batched.1} parent=0 // pred_region
    _
  $region17: #{pred_matrix_linear_batched.1} parent=0 // pred_fallthru
    _
  // Predicated region
  $region18: #{pred_matrix_linear_batched.1} parent=0 // pred_check
    _
  $region19: #{pred_matrix_linear_batched.1} parent=0 // pred_check_branch
    %738 = sbr.rel (0) target = $region21
  $region20: #{pred_matrix_linear_batched.1} parent=0 // pred_region
    _
  $region21: #{pred_matrix_linear_batched.1} parent=0 // pred_fallthru
    _

</llo_original>
